<compile_context>
chip_gen: v5e
topology: v5e:2x2
jax: 0.10.0
libtpu: 0.0.40
codegen_flags: <defaults>
</compile_context>

<pallas_src>
import jax
import jax.numpy as jnp
from jax.experimental import pallas as pl
from jax.experimental.pallas import tpu as pltpu

TILE_F = 128  # features per grid step (multiple of 128 -> lane-dense, unmasked stores)
_EPS = 1e-8   # guards theta + mu == 0 (both softplus underflow) -> avoids 0 * inf = NaN


def _softplus(x):
    # Numerically stable softplus, matches F.softplus / jax.nn.softplus (f32 math).
    return jnp.maximum(x, 0.0) + jnp.log1p(jnp.exp(-jnp.abs(x)))


def nb_decoder_kernel(z_ref, w1_ref, b1_ref, w2_ref, b2_ref, r_ref, p_ref):
    # Layer 1: relu(z @ W1 + b1).  Tiny (batch x d_z x hidden); recomputed per feature
    # tile so the grid axis can stay "parallel" (megacore-safe).  z/W1/b1 are resident.
    h = jnp.dot(z_ref[...], w1_ref[...], preferred_element_type=jnp.float32)
    h = jnp.maximum(h + b1_ref[...], 0.0)

    # Head matmul for this feature tile: (batch, hidden) @ (hidden, 2*TILE_F).
    # bf16 operands, f32 accumulation; bias add in f32.
    out = jnp.dot(h.astype(w2_ref.dtype), w2_ref[...],
                  preferred_element_type=jnp.float32) + b2_ref[...]

    # Wrapper permuted W2 so this tile's columns are [mu_tile | theta_tile]:
    # the chunk is a free, 128-lane-aligned static slice.
    tf = out.shape[-1] // 2
    spl = _softplus(out)               # one softplus over the whole (batch, 2*TILE_F) slab
    mu = spl[:, :tf]
    theta = spl[:, tf:]

    # p = theta / (theta + mu + eps): EUP approx reciprocal + one Newton-Raphson step
    # on the VALU (which has slack) -> ~f32 accuracy at approx-reciprocal cost.
    denom = theta + mu + _EPS
    inv = pl.reciprocal(denom, approx=True)
    inv = inv * (2.0 - denom * inv)    # NR refinement: err -> err^2

    # Two separate lane-dense tiled writebacks (no concatenate slab).
    r_ref[...] = theta
    p_ref[...] = theta * inv


def negative_binomial_decoder(z, w1, b1, w2, b2, *, tile_f=TILE_F):
    """z: (batch, d_z); w1: (d_z, hidden); b1: (1, hidden);
    w2: (hidden, 2*feat); b2: (1, 2*feat).
    Returns (total_count, probs), each (batch, feat) in float32."""
    batch, d_z = z.shape
    hidden = w1.shape[1]
    two_f = w2.shape[1]
    feat = two_f // 2
    # TODO(synk): pad the feature axis to a multiple of 128 for arbitrary #genes.
    assert feat % tile_f == 0, "feat must be a multiple of TILE_F"
    n_tiles = feat // tile_f

    # One-time layout plumbing: permute W2/b2 columns so tile j holds
    # [mu cols j*TILE_F:(j+1)*TILE_F | theta cols feat + j*TILE_F:(j+1)*TILE_F].
    mu_w = w2[:, :feat].reshape(hidden, n_tiles, tile_f)
    th_w = w2[:, feat:].reshape(hidden, n_tiles, tile_f)
    w2p = jnp.concatenate([mu_w, th_w], axis=-1).reshape(hidden, n_tiles * 2 * tile_f)
    mu_b = b2[:, :feat].reshape(1, n_tiles, tile_f)
    th_b = b2[:, feat:].reshape(1, n_tiles, tile_f)
    b2p = jnp.concatenate([mu_b, th_b], axis=-1).reshape(1, n_tiles * 2 * tile_f)

    # bf16 matmul operands (halves the dominant W2 HBM stream); biases stay f32.
    z_b = z.astype(jnp.bfloat16)
    w1_b = w1.astype(jnp.bfloat16)
    w2_b = w2p.astype(jnp.bfloat16)

    r, p = pl.pallas_call(
        nb_decoder_kernel,
        out_shape=(jax.ShapeDtypeStruct((batch, feat), jnp.float32),
                   jax.ShapeDtypeStruct((batch, feat), jnp.float32)),
        grid=(n_tiles,),
        in_specs=[
            pl.BlockSpec((batch, d_z), lambda j: (0, 0)),        # z      (resident)
            pl.BlockSpec((d_z, hidden), lambda j: (0, 0)),       # W1     (resident)
            pl.BlockSpec((1, hidden), lambda j: (0, 0)),         # b1     (resident)
            pl.BlockSpec((hidden, 2 * tile_f), lambda j: (0, j)),  # W2 tile (pipelined)
            pl.BlockSpec((1, 2 * tile_f), lambda j: (0, j)),     # b2 tile (pipelined)
        ],
        out_specs=(
            pl.BlockSpec((batch, tile_f), lambda j: (0, j)),     # r = total_count
            pl.BlockSpec((batch, tile_f), lambda j: (0, j)),     # p = probs
        ),
        compiler_params=pltpu.CompilerParams(
            dimension_semantics=("parallel",),  # independent feature tiles -> v7x 2 TCs
        ),
    )(z_b, w1_b, b1, w2_b, b2p)
    return r, p


def _reference(z, w1, b1, w2, b2):
    # Mirrors the kernel's precision choices (bf16 matmul operands, f32 accumulation,
    # f32 elementwise math, eps in the denominator).
    h = jnp.dot(z.astype(jnp.bfloat16), w1.astype(jnp.bfloat16),
                preferred_element_type=jnp.float32)
    h = jnp.maximum(h + b1, 0.0)
    out = jnp.dot(h.astype(jnp.bfloat16), w2.astype(jnp.bfloat16),
                  preferred_element_type=jnp.float32) + b2
    feat = out.shape[-1] // 2
    mu = _softplus(out[:, :feat])
    theta = _softplus(out[:, feat:])
    p = theta / (theta + mu + _EPS)
    return theta, p


if __name__ == "__main__":
    # Small shapes consistent with the module; feat = 2 tiles to exercise the grid.
    batch, d_z, hidden, feat = 8, 32, 64, 256

    key = jax.random.PRNGKey(0)
    kz, k1, k2, k3, k4 = jax.random.split(key, 5)

    z = jax.random.normal(kz, (batch, d_z), dtype=jnp.float32)
    w1 = jax.random.normal(k1, (d_z, hidden), dtype=jnp.float32) * 0.1
    b1 = jax.random.normal(k2, (1, hidden), dtype=jnp.float32) * 0.1
    w2 = jax.random.normal(k3, (hidden, 2 * feat), dtype=jnp.float32) * 0.1
    b2 = jax.random.normal(k4, (1, 2 * feat), dtype=jnp.float32) * 0.1

    r, p = negative_binomial_decoder(z, w1, b1, w2, b2)
    jax.block_until_ready((r, p))

    r_ref, p_ref = _reference(z, w1, b1, w2, b2)
    # r (= theta) matches the reference path exactly; p's NR-refined approx reciprocal
    # is accurate to ~1e-6 relative, comfortably inside 1e-3.
    assert jnp.allclose(r, r_ref, atol=1e-4, rtol=1e-4), "total_count mismatch"
    assert jnp.allclose(p, p_ref, atol=1e-3, rtol=1e-3), "probs mismatch"
    assert not bool(jnp.any(jnp.isnan(p))), "NaN in probs"

    print("KERNEL_OK")
</pallas_src>

<mosaic_0001>
module attributes {stable_mosaic.version = 11 : i64} {
  func.func @nb_decoder_kernel(%arg0: i32, %arg1: memref<8x32xbf16, #tpu.memory_space<vmem>>, %arg2: memref<32x64xbf16, #tpu.memory_space<vmem>>, %arg3: memref<1x64xf32, #tpu.memory_space<vmem>>, %arg4: memref<64x256xbf16, #tpu.memory_space<vmem>>, %arg5: memref<1x256xf32, #tpu.memory_space<vmem>>, %arg6: memref<8x128xf32, #tpu.memory_space<vmem>>, %arg7: memref<8x128xf32, #tpu.memory_space<vmem>>) attributes {dimension_semantics = [#tpu.dimension_semantics<parallel>], iteration_bounds = array<i64: 2>, scalar_prefetch = 0 : i64, scratch_operands = 0 : i64, tpu.core_type = #tpu.core_type<tc>, window_params = [{pipeline_mode = #tpu.pipeline_mode<synchronous>, transform_indices = @transform_0, window_bounds = array<i64: 8, 32>}, {pipeline_mode = #tpu.pipeline_mode<synchronous>, transform_indices = @transform_1, window_bounds = array<i64: 32, 64>}, {pipeline_mode = #tpu.pipeline_mode<synchronous>, transform_indices = @transform_2, window_bounds = array<i64: 1, 64>}, {transform_indices = @transform_3, window_bounds = array<i64: 64, 256>}, {transform_indices = @transform_4, window_bounds = array<i64: 1, 256>}, {transform_indices = @transform_5, window_bounds = array<i64: 8, 128>}, {transform_indices = @transform_6, window_bounds = array<i64: 8, 128>}]} {
    %c0 = arith.constant 0 : index
    %c0_0 = arith.constant 0 : index
    %0 = vector.load %arg1[%c0, %c0_0] : memref<8x32xbf16, #tpu.memory_space<vmem>>, vector<8x32xbf16>
    %c0_1 = arith.constant 0 : index
    %c0_2 = arith.constant 0 : index
    %1 = vector.load %arg2[%c0_1, %c0_2] : memref<32x64xbf16, #tpu.memory_space<vmem>>, vector<32x64xbf16>
    %cst = arith.constant dense<0.000000e+00> : vector<8x64xf32>
    %2 = tpu.matmul %0, %1, %cst {dimension_numbers = #tpu.dot_dimension_numbers<[1], [0], [0], [1], [0, 0, 1, 1], [], []>} : vector<8x32xbf16>, vector<32x64xbf16>, vector<8x64xf32> -> vector<8x64xf32>
    %c0_3 = arith.constant 0 : index
    %c0_4 = arith.constant 0 : index
    %3 = vector.load %arg3[%c0_3, %c0_4] : memref<1x64xf32, #tpu.memory_space<vmem>>, vector<1x64xf32>
    %4 = vector.broadcast %3 : vector<1x64xf32> to vector<8x64xf32>
    %5 = arith.addf %2, %4 : vector<8x64xf32>
    %cst_5 = arith.constant 0.000000e+00 : f32
    %6 = vector.broadcast %cst_5 : f32 to vector<8x64xf32>
    %7 = arith.maximumf %5, %6 : vector<8x64xf32>
    %8 = arith.truncf %7 : vector<8x64xf32> to vector<8x64xbf16>
    %c0_6 = arith.constant 0 : index
    %c0_7 = arith.constant 0 : index
    %9 = vector.load %arg4[%c0_6, %c0_7] : memref<64x256xbf16, #tpu.memory_space<vmem>>, vector<64x256xbf16>
    %cst_8 = arith.constant dense<0.000000e+00> : vector<8x256xf32>
    %10 = tpu.matmul %8, %9, %cst_8 {dimension_numbers = #tpu.dot_dimension_numbers<[1], [0], [0], [1], [0, 0, 1, 1], [], []>} : vector<8x64xbf16>, vector<64x256xbf16>, vector<8x256xf32> -> vector<8x256xf32>
    %c0_9 = arith.constant 0 : index
    %c0_10 = arith.constant 0 : index
    %11 = vector.load %arg5[%c0_9, %c0_10] : memref<1x256xf32, #tpu.memory_space<vmem>>, vector<1x256xf32>
    %12 = vector.broadcast %11 : vector<1x256xf32> to vector<8x256xf32>
    %13 = arith.addf %10, %12 : vector<8x256xf32>
    %cst_11 = arith.constant 0.000000e+00 : f32
    %14 = vector.broadcast %cst_11 : f32 to vector<8x256xf32>
    %15 = arith.maximumf %13, %14 : vector<8x256xf32>
    %16 = math.absf %13 : vector<8x256xf32>
    %cst_12 = arith.constant 0.000000e+00 : f32
    %17 = vector.broadcast %cst_12 : f32 to vector<8x256xf32>
    %18 = arith.subf %17, %16 : vector<8x256xf32>
    %19 = math.exp %18 : vector<8x256xf32>
    %20 = math.log1p %19 : vector<8x256xf32>
    %21 = arith.addf %15, %20 : vector<8x256xf32>
    %22 = vector.extract_strided_slice %21 {offsets = [0, 0], sizes = [8, 128], strides = [1, 1]} : vector<8x256xf32> to vector<8x128xf32>
    %23 = vector.extract_strided_slice %21 {offsets = [0, 128], sizes = [8, 128], strides = [1, 1]} : vector<8x256xf32> to vector<8x128xf32>
    %24 = arith.addf %23, %22 : vector<8x128xf32>
    %cst_13 = arith.constant 9.99999993E-9 : f32
    %25 = vector.broadcast %cst_13 : f32 to vector<8x128xf32>
    %26 = arith.addf %24, %25 : vector<8x128xf32>
    %27 = tpu.reciprocal %26 {approx = true} : vector<8x128xf32> -> vector<8x128xf32>
    %28 = arith.mulf %26, %27 : vector<8x128xf32>
    %cst_14 = arith.constant 2.000000e+00 : f32
    %29 = vector.broadcast %cst_14 : f32 to vector<8x128xf32>
    %30 = arith.subf %29, %28 : vector<8x128xf32>
    %31 = arith.mulf %27, %30 : vector<8x128xf32>
    %c0_15 = arith.constant 0 : index
    %c0_16 = arith.constant 0 : index
    %32 = vector.load %arg6[%c0_15, %c0_16] : memref<8x128xf32, #tpu.memory_space<vmem>>, vector<8x128xf32>
    tpu.vector_store %arg6[%c0_15, %c0_16], %23 {strides = array<i32>} : memref<8x128xf32, #tpu.memory_space<vmem>>, vector<8x128xf32>,
    %33 = arith.mulf %23, %31 : vector<8x128xf32>
    %c0_17 = arith.constant 0 : index
    %c0_18 = arith.constant 0 : index
    %34 = vector.load %arg7[%c0_17, %c0_18] : memref<8x128xf32, #tpu.memory_space<vmem>>, vector<8x128xf32>
    tpu.vector_store %arg7[%c0_17, %c0_18], %33 {strides = array<i32>} : memref<8x128xf32, #tpu.memory_space<vmem>>, vector<8x128xf32>,
    return
  }
  func.func @transform_0(%arg0: i32) -> (i32, i32) {
    %c0_i32 = arith.constant 0 : i32
    %c0_i32_0 = arith.constant 0 : i32
    %c0_i32_1 = arith.constant 0 : i32
    return %c0_i32, %c0_i32_0 : i32, i32
  }
  func.func @transform_1(%arg0: i32) -> (i32, i32) {
    %c0_i32 = arith.constant 0 : i32
    %c0_i32_0 = arith.constant 0 : i32
    %c0_i32_1 = arith.constant 0 : i32
    return %c0_i32, %c0_i32_0 : i32, i32
  }
  func.func @transform_2(%arg0: i32) -> (i32, i32) {
    %c0_i32 = arith.constant 0 : i32
    %c0_i32_0 = arith.constant 0 : i32
    %c0_i32_1 = arith.constant 0 : i32
    return %c0_i32, %c0_i32_0 : i32, i32
  }
  func.func @transform_3(%arg0: i32) -> (i32, i32) {
    %c0_i32 = arith.constant 0 : i32
    %c0_i32_0 = arith.constant 0 : i32
    return %c0_i32, %arg0 : i32, i32
  }
  func.func @transform_4(%arg0: i32) -> (i32, i32) {
    %c0_i32 = arith.constant 0 : i32
    %c0_i32_0 = arith.constant 0 : i32
    return %c0_i32, %arg0 : i32, i32
  }
  func.func @transform_5(%arg0: i32) -> (i32, i32) {
    %c0_i32 = arith.constant 0 : i32
    %c0_i32_0 = arith.constant 0 : i32
    return %c0_i32, %arg0 : i32, i32
  }
  func.func @transform_6(%arg0: i32) -> (i32, i32) {
    %c0_i32 = arith.constant 0 : i32
    %c0_i32_0 = arith.constant 0 : i32
    return %c0_i32, %arg0 : i32, i32
  }
}

</mosaic_0001>

<llo_original>
// kernel: tpu_custom_call.1
$region0: #{tpu_custom_call.1}
  #allocation0 [shape = 'u32[]', space=smem, size = 0x4, offset = 0x4, fixed_abs, tag = 'smem constant byte address 0x4 - core index']
  #allocation1 [shape = 'u32[72,128]{1,0:T(1,128)}', space=vmem, size = 0x9000, scoped, tag = 'internal scratch']
  %s0 = inlined_call_operand.hbm [shape: bf16[8,32], index: 0, kind: input, shape index: {}]
  %s1 = inlined_call_operand.hbm [shape: bf16[32,64], index: 1, kind: input, shape index: {}]
  %s2 = inlined_call_operand.vmem [shape: f32[1,64], index: 2, kind: input, shape index: {}]
  %s3 = inlined_call_operand.hbm [shape: bf16[64,512], index: 3, kind: input, shape index: {}]
  %s4 = inlined_call_operand.hbm [shape: f32[1,512], index: 4, kind: input, shape index: {}]
  %s5 = inlined_call_operand.hbm [shape: f32[8,256], index: 5, kind: output, shape index: {0}]
  %s6 = inlined_call_operand.hbm [shape: f32[8,256], index: 6, kind: output, shape index: {1}]
  %7 = xla_tuple %s5, %s6
  %s8 = sld [smem:[#allocation0]]
  $region77: #{tpu_custom_call.1} parent=0
    _
  %s10 = ssub.s32 1, %s8
  %s11 = scalar_select 0, %s10, %s8
  $region1: #{tpu_custom_call.1} parent=0
    #allocation2 [shape = 'u8[2048]{0}', space=vmem, size = 0x800, scoped, tag = 'input window, operand 0, single buffered']
    #allocation3 [shape = 's32[2]{0}', space=sflag, size = 0x8, scoped, tag = 'scoped memory for tpu_custom_call.1']
    #allocation4 [shape = 's32[2]{0}', space=sflag, size = 0x8, scoped, tag = 'scoped memory for tpu_custom_call.1']
    #allocation5 [shape = 'u8[8192]{0}', space=vmem, size = 0x2000, scoped, tag = 'input window, operand 1, single buffered']
    #allocation6 [shape = 's32[1]{0}', space=sflag, size = 0x4, scoped, tag = 'scoped memory for tpu_custom_call.1']
    #allocation7 [shape = 'u8[65536]{0}', space=vmem, size = 0x10000, scoped, tag = 'input window, operand 3']
    #allocation8 [shape = 'u8[2048]{0}', space=vmem, size = 0x800, scoped, tag = 'input window, operand 4']
    #allocation9 [shape = 'u8[8192]{0}', space=vmem, size = 0x2000, scoped, tag = 'output window, operand 0']
    #allocation10 [shape = 'u8[8192]{0}', space=vmem, size = 0x2000, scoped, tag = 'output window, operand 1']
    #allocation11 [shape = 's32[2]{0}', space=sflag, size = 0x8, scoped, tag = 'scoped memory for tpu_custom_call.1']
    %12 = vsyncpa [#allocation3], 0
    %13 = vsyncpa [#allocation6], 0
    %14 = vsyncpa [#allocation4], 0
    %s15 = scalar_lea.sflag [#allocation4], 1
    %16 = vsyncpa %s15, 0
    %17 = vsyncpa [#allocation11], 0
    %s18 = scalar_lea.sflag [#allocation11], 1
    %19 = vsyncpa %s18, 0
    loop: start=0, step=1, limit=4
    $region2: #{tpu_custom_call.1} parent=1 // loop_pre_header
      _
    $region3: #{tpu_custom_call.1} parent=1 // loop_header
      %s21 = sphi 0, %s25
      %p22 = scmp.ge.s32.totalorder %s21, 4
      %s29 = sphi 0, %s29
      %s31 = sphi 0, %s29
      %s32 = sphi 0, %s31
      %s46 = sphi 0, %s32
      %s50 = sphi 0, %s50
      %s52 = sphi 0, %s50
      %s53 = sphi 0, %s52
      %s67 = sphi 0, %s53
      %s71 = sphi 0, %s71
      %s73 = sphi 0, %s71
      %s74 = sphi 0, %s73
      %s88 = sphi 0, %s74
      %s94 = sphi 0, %s96
      %s97 = sphi 0, %s94
      %s98 = sphi 0, %s97
      %s114 = sphi 0, %s98
      %s120 = sphi 0, %s122
      %s123 = sphi 0, %s120
      %s124 = sphi 0, %s123
      %s140 = sphi 0, %s124
      %s146 = sphi 0, %s148
      %s149 = sphi 0, %s146
      %s150 = sphi 0, %s149
      %s166 = sphi 0, %s150
      %s172 = sphi 0, %s174
      %s175 = sphi 0, %s172
      %s176 = sphi 0, %s175
      %s192 = sphi 0, %s176
    $region4: #{tpu_custom_call.1} parent=1 // loop_header_branch
      %24 = sbr.rel (%p22) target = $region8
    $region5: #{tpu_custom_call.1} parent=1 // loop_body
      %s26 = ssub.s32 %s21, 1
      %s27 = ssub.s32 %s21, 2
      %s28 = sadd.s32 %s21, 1
      %s30 = sadd.s32 %s29, 1
      %p33 = scmp.eq.s32.totalorder %s21, 1
      %p34 = scmp.ne.s32.totalorder %s29, %s31
      %p35 = scmp.eq.s32.totalorder %s21, 0
      %p36 = por %p34, %p35
      %p37 = scmp.ne.s32.totalorder %s29, %s31
      %p38 = scmp.eq.s32.totalorder %s26, 1
      %p39 = por %p37, %p38
      %p40 = scmp.ne.s32.totalorder %s31, %s32
      %p41 = scmp.eq.s32.totalorder %s26, 0
      %p42 = por %p40, %p41
      %p43 = scmp.ne.s32.totalorder %s31, %s32
      %p44 = scmp.eq.s32.totalorder %s27, 1
      %p45 = por %p43, %p44
      %p47 = scmp.ne.s32.totalorder %s32, %s46
      %p48 = scmp.eq.s32.totalorder %s27, 0
      %p49 = por %p47, %p48
      %s51 = sadd.s32 %s50, 1
      %p54 = scmp.eq.s32.totalorder %s21, 1
      %p55 = scmp.ne.s32.totalorder %s50, %s52
      %p56 = scmp.eq.s32.totalorder %s21, 0
      %p57 = por %p55, %p56
      %p58 = scmp.ne.s32.totalorder %s50, %s52
      %p59 = scmp.eq.s32.totalorder %s26, 1
      %p60 = por %p58, %p59
      %p61 = scmp.ne.s32.totalorder %s52, %s53
      %p62 = scmp.eq.s32.totalorder %s26, 0
      %p63 = por %p61, %p62
      %p64 = scmp.ne.s32.totalorder %s52, %s53
      %p65 = scmp.eq.s32.totalorder %s27, 1
      %p66 = por %p64, %p65
      %p68 = scmp.ne.s32.totalorder %s53, %s67
      %p69 = scmp.eq.s32.totalorder %s27, 0
      %p70 = por %p68, %p69
      %s72 = sadd.s32 %s71, 1
      %p75 = scmp.eq.s32.totalorder %s21, 1
      %p76 = scmp.ne.s32.totalorder %s71, %s73
      %p77 = scmp.eq.s32.totalorder %s21, 0
      %p78 = por %p76, %p77
      %p79 = scmp.ne.s32.totalorder %s71, %s73
      %p80 = scmp.eq.s32.totalorder %s26, 1
      %p81 = por %p79, %p80
      %p82 = scmp.ne.s32.totalorder %s73, %s74
      %p83 = scmp.eq.s32.totalorder %s26, 0
      %p84 = por %p82, %p83
      %p85 = scmp.ne.s32.totalorder %s73, %s74
      %p86 = scmp.eq.s32.totalorder %s27, 1
      %p87 = por %p85, %p86
      %p89 = scmp.ne.s32.totalorder %s74, %s88
      %p90 = scmp.eq.s32.totalorder %s27, 0
      %p91 = por %p89, %p90
      %s92 = ssub.s32 %s21, %s28
      %p93 = scmp.eq.s32.totalorder %s92, 0
      %s95 = sadd.s32 %s94, 1
      %s96 = scalar_select %p93, %s94, %s95
      %p99 = pneg %p93
      %p100 = scmp.eq.s32.totalorder %s21, 1
      %p101 = por %p99, %p100
      %p102 = scmp.ne.s32.totalorder %s94, %s97
      %p103 = scmp.eq.s32.totalorder %s21, 0
      %p104 = por %p102, %p103
      %p105 = scmp.ne.s32.totalorder %s94, %s97
      %p106 = scmp.eq.s32.totalorder %s26, 1
      %p107 = por %p105, %p106
      %p108 = scmp.ne.s32.totalorder %s97, %s98
      %p109 = scmp.eq.s32.totalorder %s26, 0
      %p110 = por %p108, %p109
      %p111 = scmp.ne.s32.totalorder %s97, %s98
      %p112 = scmp.eq.s32.totalorder %s27, 1
      %p113 = por %p111, %p112
      %p115 = scmp.ne.s32.totalorder %s98, %s114
      %p116 = scmp.eq.s32.totalorder %s27, 0
      %p117 = por %p115, %p116
      %s118 = ssub.s32 %s21, %s28
      %p119 = scmp.eq.s32.totalorder %s118, 0
      %s121 = sadd.s32 %s120, 1
      %s122 = scalar_select %p119, %s120, %s121
      %p125 = pneg %p119
      %p126 = scmp.eq.s32.totalorder %s21, 1
      %p127 = por %p125, %p126
      %p128 = scmp.ne.s32.totalorder %s120, %s123
      %p129 = scmp.eq.s32.totalorder %s21, 0
      %p130 = por %p128, %p129
      %p131 = scmp.ne.s32.totalorder %s120, %s123
      %p132 = scmp.eq.s32.totalorder %s26, 1
      %p133 = por %p131, %p132
      %p134 = scmp.ne.s32.totalorder %s123, %s124
      %p135 = scmp.eq.s32.totalorder %s26, 0
      %p136 = por %p134, %p135
      %p137 = scmp.ne.s32.totalorder %s123, %s124
      %p138 = scmp.eq.s32.totalorder %s27, 1
      %p139 = por %p137, %p138
      %p141 = scmp.ne.s32.totalorder %s124, %s140
      %p142 = scmp.eq.s32.totalorder %s27, 0
      %p143 = por %p141, %p142
      %s144 = ssub.s32 %s21, %s28
      %p145 = scmp.eq.s32.totalorder %s144, 0
      %s147 = sadd.s32 %s146, 1
      %s148 = scalar_select %p145, %s146, %s147
      %p151 = pneg %p145
      %p152 = scmp.eq.s32.totalorder %s21, 1
      %p153 = por %p151, %p152
      %p154 = scmp.ne.s32.totalorder %s146, %s149
      %p155 = scmp.eq.s32.totalorder %s21, 0
      %p156 = por %p154, %p155
      %p157 = scmp.ne.s32.totalorder %s146, %s149
      %p158 = scmp.eq.s32.totalorder %s26, 1
      %p159 = por %p157, %p158
      %p160 = scmp.ne.s32.totalorder %s149, %s150
      %p161 = scmp.eq.s32.totalorder %s26, 0
      %p162 = por %p160, %p161
      %p163 = scmp.ne.s32.totalorder %s149, %s150
      %p164 = scmp.eq.s32.totalorder %s27, 1
      %p165 = por %p163, %p164
      %p167 = scmp.ne.s32.totalorder %s150, %s166
      %p168 = scmp.eq.s32.totalorder %s27, 0
      %p169 = por %p167, %p168
      %s170 = ssub.s32 %s21, %s28
      %p171 = scmp.eq.s32.totalorder %s170, 0
      %s173 = sadd.s32 %s172, 1
      %s174 = scalar_select %p171, %s172, %s173
      %p177 = pneg %p171
      %p178 = scmp.eq.s32.totalorder %s21, 1
      %p179 = por %p177, %p178
      %p180 = scmp.ne.s32.totalorder %s172, %s175
      %p181 = scmp.eq.s32.totalorder %s21, 0
      %p182 = por %p180, %p181
      %p183 = scmp.ne.s32.totalorder %s172, %s175
      %p184 = scmp.eq.s32.totalorder %s26, 1
      %p185 = por %p183, %p184
      %p186 = scmp.ne.s32.totalorder %s175, %s176
      %p187 = scmp.eq.s32.totalorder %s26, 0
      %p188 = por %p186, %p187
      %p189 = scmp.ne.s32.totalorder %s175, %s176
      %p190 = scmp.eq.s32.totalorder %s27, 1
      %p191 = por %p189, %p190
      %p193 = scmp.ne.s32.totalorder %s176, %s192
      %p194 = scmp.eq.s32.totalorder %s27, 0
      %p195 = por %p193, %p194
      %p196 = scmp.le.s32.totalorder 1, %s21
      %p197 = scmp.lt.s32.totalorder %s21, 3
      %p198 = pnand %p196, %p197
      %p199 = pneg %p198
      // Predicated region
      $region9: #{tpu_custom_call.1} parent=5 // pred_check
        _
      $region10: #{tpu_custom_call.1} parent=5 // pred_check_branch
        %201 = sbr.rel (%p198) target = $region12
      $region11: #{tpu_custom_call.1} parent=5 // pred_region
        %s202 = ssub.s32 %s21, 1
        // Predicated region
        $region13: #{tpu_custom_call.1} parent=11 // pred_check
          %p203 = pneg %p42
        $region14: #{tpu_custom_call.1} parent=11 // pred_check_branch
          %205 = sbr.rel (%p203) target = $region16
        $region15: #{tpu_custom_call.1} parent=11 // pred_region
          %207 = vsyncadd [#allocation3], 0
          %s209 = sshll.u32 %s0, 4
          %s210 = int_to_ptr.hbm [resolvable:$true] %s209
          %s211 = sshll.u32 [#allocation2], 4
          %s212 = int_to_ptr.vmem [resolvable:$true] %s211
          %214 = dma.hbm_to_vmem [thread:$0]  %s210, 64, %s212, [#allocation3]
        $region16: #{tpu_custom_call.1} parent=11 // pred_fallthru
          _
        // Predicated region
        $region17: #{tpu_custom_call.1} parent=11 // pred_check
          %p215 = pneg %p63
        $region18: #{tpu_custom_call.1} parent=11 // pred_check_branch
          %217 = sbr.rel (%p215) target = $region20
        $region19: #{tpu_custom_call.1} parent=11 // pred_region
          %219 = vsyncadd [#allocation6], 0
          %s220 = sshll.u32 %s1, 4
          %s221 = int_to_ptr.hbm [resolvable:$true] %s220
          %s222 = sshll.u32 [#allocation5], 4
          %s223 = int_to_ptr.vmem [resolvable:$true] %s222
          %228 = dma.hbm_to_vmem [thread:$0]  %s221, 256, %s223, [#allocation6], 64, 64, 4
        $region20: #{tpu_custom_call.1} parent=11 // pred_fallthru
          _
        // Predicated region
        $region21: #{tpu_custom_call.1} parent=11 // pred_check
          %p229 = pneg %p84
        $region22: #{tpu_custom_call.1} parent=11 // pred_check_branch
          %231 = sbr.rel (%p229) target = $region24
        $region23: #{tpu_custom_call.1} parent=11 // pred_region
          _
        $region24: #{tpu_custom_call.1} parent=11 // pred_fallthru
          _
      $region12: #{tpu_custom_call.1} parent=5 // pred_fallthru
        _
      %p232 = scmp.lt.s32.totalorder %s21, 2
      // Predicated region
      $region25: #{tpu_custom_call.1} parent=5 // pred_check
        %p233 = pneg %p232
      $region26: #{tpu_custom_call.1} parent=5 // pred_check_branch
        %235 = sbr.rel (%p233) target = $region28
      $region27: #{tpu_custom_call.1} parent=5 // pred_region
        // Predicated region
        $region29: #{tpu_custom_call.1} parent=27 // pred_check
          %p236 = pneg %p104
        $region30: #{tpu_custom_call.1} parent=27 // pred_check_branch
          %238 = sbr.rel (%p236) target = $region32
        $region31: #{tpu_custom_call.1} parent=27 // pred_region
          %s239 = sand.u32 %s21, 1
          %s240 = scalar_lea.sflag [#allocation3], %s239
          %s241 = sand.u32 %s94, 1
          %s242 = smul.addr %s241, 64
          %s243 = scalar_lea.vmem [#allocation7], %s242
          %s244 = smul.u32 2, %s21
          %246 = vsyncadd %s240, 0
          %s247 = smul.addr %s244, 4
          %s248 = scalar_lea.hbm %s3, %s247
          %s249 = sshll.u32 %s248, 4
          %s250 = int_to_ptr.hbm [resolvable:$true] %s249
          %s251 = sshll.u32 %s243, 4
          %s252 = int_to_ptr.vmem [resolvable:$true] %s251
          %257 = dma.hbm_to_vmem [thread:$0]  %s250, 1024, %s252, %s240, 256, 128, 8
        $region32: #{tpu_custom_call.1} parent=27 // pred_fallthru
          _
        // Predicated region
        $region33: #{tpu_custom_call.1} parent=27 // pred_check
          %p258 = pneg %p130
        $region34: #{tpu_custom_call.1} parent=27 // pred_check_branch
          %260 = sbr.rel (%p258) target = $region36
        $region35: #{tpu_custom_call.1} parent=27 // pred_region
          %s261 = sand.u32 %s21, 1
          %s262 = scalar_lea.sflag [#allocation3], %s261
          %s263 = sand.u32 %s120, 1
          %s264 = smul.addr %s263, 2
          %s265 = scalar_lea.vmem [#allocation8], %s264
          %s266 = smul.u32 2, %s21
          %268 = vsyncadd %s262, 0
          %s269 = scalar_lea.hbm %s4, %s266
          %s271 = sshll.u32 %s269, 4
          %s272 = int_to_ptr.hbm [resolvable:$true] %s271
          %s273 = sshll.u32 %s265, 4
          %s274 = int_to_ptr.vmem [resolvable:$true] %s273
          %276 = dma.hbm_to_vmem [thread:$0]  %s272, 32, %s274, %s262
        $region36: #{tpu_custom_call.1} parent=27 // pred_fallthru
          _
      $region28: #{tpu_custom_call.1} parent=5 // pred_fallthru
        _
      %p277 = scmp.le.s32.totalorder 1, %s21
      %p278 = scmp.lt.s32.totalorder %s21, 3
      %p279 = pnand %p277, %p278
      %p280 = pneg %p279
      // Predicated region
      $region37: #{tpu_custom_call.1} parent=5 // pred_check
        _
      $region38: #{tpu_custom_call.1} parent=5 // pred_check_branch
        %282 = sbr.rel (%p279) target = $region40
      $region39: #{tpu_custom_call.1} parent=5 // pred_region
        %s283 = ssub.s32 %s21, 1
        // Predicated region
        $region41: #{tpu_custom_call.1} parent=39 // pred_check
          %p284 = pneg %p42
        $region42: #{tpu_custom_call.1} parent=39 // pred_check_branch
          %286 = sbr.rel (%p284) target = $region44
        $region43: #{tpu_custom_call.1} parent=39 // pred_region
          %288 = dma.done [#allocation3], 64
        $region44: #{tpu_custom_call.1} parent=39 // pred_fallthru
          _
        // Predicated region
        $region45: #{tpu_custom_call.1} parent=39 // pred_check
          %p289 = pneg %p63
        $region46: #{tpu_custom_call.1} parent=39 // pred_check_branch
          %291 = sbr.rel (%p289) target = $region48
        $region47: #{tpu_custom_call.1} parent=39 // pred_region
          %293 = dma.done [#allocation6], 256
        $region48: #{tpu_custom_call.1} parent=39 // pred_fallthru
          _
        %s294 = sand.u32 %s26, 1
        %s295 = scalar_lea.sflag [#allocation3], %s294
        %s296 = sand.u32 %s97, 1
        %s297 = smul.addr %s296, 64
        %s298 = scalar_lea.vmem [#allocation7], %s297
        // Predicated region
        $region49: #{tpu_custom_call.1} parent=39 // pred_check
          %p299 = pneg %p110
        $region50: #{tpu_custom_call.1} parent=39 // pred_check_branch
          %301 = sbr.rel (%p299) target = $region52
        $region51: #{tpu_custom_call.1} parent=39 // pred_region
          %303 = dma.done %s295, 1024
        $region52: #{tpu_custom_call.1} parent=39 // pred_fallthru
          _
        %s304 = sand.u32 %s26, 1
        %s305 = scalar_lea.sflag [#allocation3], %s304
        %s306 = sand.u32 %s123, 1
        %s307 = smul.addr %s306, 2
        %s308 = scalar_lea.vmem [#allocation8], %s307
        // Predicated region
        $region53: #{tpu_custom_call.1} parent=39 // pred_check
          %p309 = pneg %p136
        $region54: #{tpu_custom_call.1} parent=39 // pred_check_branch
          %311 = sbr.rel (%p309) target = $region56
        $region55: #{tpu_custom_call.1} parent=39 // pred_region
          %313 = dma.done %s305, 32
        $region56: #{tpu_custom_call.1} parent=39 // pred_fallthru
          _
        %p314 = pneg %p42
        %p315 = pneg %p39
        %p316 = pneg %p63
        %p317 = pneg %p60
        %p318 = pneg %p84
        %p319 = pneg %p81
        %s320 = sand.u32 %s26, 1
        %s321 = scalar_lea.sflag [#allocation3], %s320
        %s322 = sand.u32 %s97, 1
        %s323 = smul.addr %s322, 64
        %s324 = scalar_lea.vmem [#allocation7], %s323
        %p325 = pneg %p110
        %p326 = pneg %p107
        %s327 = sand.u32 %s26, 1
        %s328 = scalar_lea.sflag [#allocation3], %s327
        %s329 = sand.u32 %s123, 1
        %s330 = smul.addr %s329, 2
        %s331 = scalar_lea.vmem [#allocation8], %s330
        %p332 = pneg %p136
        %p333 = pneg %p133
        %p334 = pneg %p162
        %p335 = pneg %p159
        %s336 = sand.u32 %s149, 1
        %s337 = scalar_lea.sflag [#allocation4], %s336
        %s338 = sand.u32 %s149, 1
        %s339 = smul.addr %s338, 8
        %s340 = scalar_lea.vmem [#allocation9], %s339
        %p341 = pneg %p188
        %p342 = pneg %p185
        %s343 = sand.u32 %s175, 1
        %s344 = scalar_lea.sflag [#allocation11], %s343
        %s345 = sand.u32 %s175, 1
        %s346 = smul.addr %s345, 8
        %s347 = scalar_lea.vmem [#allocation10], %s346
        %s348 = smul.u32 2, %s26
        %s349 = smul.u32 2, %s26
        %v351 = vld [vmem:[#allocation2] sm:$0xf]
        %v352 = vld [vmem:[#allocation5] sm:$0xf]
        %v353 = vld [vmem:[#allocation5 + $0x4] sm:$0xf]
        %v354 = vld [vmem:[#allocation5 + $0x8] sm:$0xf]
        %v355 = vld [vmem:[#allocation5 + $0xc] sm:$0xf]
        %v356 = vld [vmem:[%s2] sm:$0x1]
        %v358 = vperm.slane %v356, 0
        %v364 = vunpack.c.l.b16 %v352
        %v365 = vunpack.c.l.b16 %v353
        %v366 = vunpack.c.l.b16 %v354
        %v367 = vunpack.c.l.b16 %v355
        %v368 = vpack.c.b16 %v365, %v364
        %v369 = vpack.c.b16 %v367, %v366
        %vm372 = vcmask 261120
        %v374 = vsel %vm372, %v351, 0
        %376 = vmatpush.bf16.msra.mxu0 0
        %377 = vmatpush.bf16.msra.mxu0 0
        %378 = vmatpush.bf16.msra.mxu0 0
        %379 = vmatpush.bf16.msra.mxu0 0
        %380 = vmatpush.bf16.msra.mxu0 0
        %381 = vmatpush.bf16.msra.mxu0 0
        %382 = vmatpush.bf16.msra.mxu0 %v369
        %383 = vmatpush.bf16.msra.mxu0 %v368
        %384 = vmatmul.bf16.gmra.mxu0 %v374
        %v385 = vpop.f32.mrf.mxu0
        %v386 = vadd.f32 %v358, %v385
        %v387 = vpop.f32.mrf.mxu0
        %388 = vdwg.mxu0
        %v389 = vmax.f32 %v386, 0.0
        %v390 = vpack.c.bf16 %v389, %v389
        %v391 = vld [vmem:[%s298] sm:$0xff]
        %v392 = vld [vmem:[%s298 + $0x8] sm:$0xff]
        %v393 = vld [vmem:[%s298 + $0x10] sm:$0xff]
        %v394 = vld [vmem:[%s298 + $0x18] sm:$0xff]
        %v395 = vld [vmem:[%s298 + $0x20] sm:$0xff]
        %v396 = vld [vmem:[%s298 + $0x28] sm:$0xff]
        %v397 = vld [vmem:[%s298 + $0x30] sm:$0xff]
        %v398 = vld [vmem:[%s298 + $0x38] sm:$0xff]
        %v399 = vld [vmem:[%s308] sm:$0x3]
        %v401 = vperm.slane %v399, 0
        %v402 = vperm.slane %v399, 1
        %v413 = vunpack.c.l.b16 %v391
        %v414 = vunpack.c.h.b16 %v391
        %v415 = vunpack.c.l.b16 %v392
        %v416 = vunpack.c.h.b16 %v392
        %v417 = vunpack.c.l.b16 %v393
        %v418 = vunpack.c.h.b16 %v393
        %v419 = vunpack.c.l.b16 %v394
        %v420 = vunpack.c.h.b16 %v394
        %v421 = vunpack.c.l.b16 %v395
        %v422 = vunpack.c.h.b16 %v395
        %v423 = vunpack.c.l.b16 %v396
        %v424 = vunpack.c.h.b16 %v396
        %v425 = vunpack.c.l.b16 %v397
        %v426 = vunpack.c.h.b16 %v397
        %v427 = vunpack.c.l.b16 %v398
        %v428 = vunpack.c.h.b16 %v398
        %v429 = vpack.c.b16 %v415, %v413
        %v430 = vpack.c.b16 %v416, %v414
        %v431 = vpack.c.b16 %v419, %v417
        %v432 = vpack.c.b16 %v420, %v418
        %v433 = vpack.c.b16 %v423, %v421
        %v434 = vpack.c.b16 %v424, %v422
        %v435 = vpack.c.b16 %v427, %v425
        %v436 = vpack.c.b16 %v428, %v426
        %vm445 = vcmask 523264
        %v447 = vsel %vm445, %v390, 0
        %449 = vmatpush.bf16.msra.mxu0 0
        %450 = vmatpush.bf16.msra.mxu0 0
        %451 = vmatpush.bf16.msra.mxu0 0
        %452 = vmatpush.bf16.msra.mxu0 0
        %453 = vmatpush.bf16.msra.mxu0 %v435
        %454 = vmatpush.bf16.msra.mxu0 %v433
        %455 = vmatpush.bf16.msra.mxu0 %v431
        %456 = vmatpush.bf16.msra.mxu0 %v429
        %457 = vmatmul.bf16.gmra.mxu0 %v447
        %v458 = vpop.f32.mrf.mxu0
        %v459 = vadd.f32 %v401, %v458
        %v460 = vpop.f32.mrf.mxu0
        %461 = vdwg.mxu0
        %462 = vmatpush.bf16.msra.mxu0 0
        %463 = vmatpush.bf16.msra.mxu0 0
        %464 = vmatpush.bf16.msra.mxu0 0
        %465 = vmatpush.bf16.msra.mxu0 0
        %466 = vmatpush.bf16.msra.mxu0 %v436
        %467 = vmatpush.bf16.msra.mxu0 %v434
        %468 = vmatpush.bf16.msra.mxu0 %v432
        %469 = vmatpush.bf16.msra.mxu0 %v430
        %470 = vmatmul.bf16.gmra.mxu0 %v447
        %v471 = vpop.f32.mrf.mxu0
        %v472 = vadd.f32 %v402, %v471
        %v473 = vpop.f32.mrf.mxu0
        %474 = vdwg.mxu0
        %v475 = vmax.f32 %v459, 0.0
        %v476 = vmax.f32 %v472, 0.0
        %v477 = vand.u32 2147483647, %v459
        %v478 = vand.u32 2147483647, %v472
        %v479 = vsub.f32 0.0, %v477
        %v480 = vsub.f32 0.0, %v478
        %v481 = vmul.f32 %v479, 1.442695
        %v482 = vpow.pop %v481
        %v483 = vmul.f32 %v480, 1.442695
        %v484 = vpow.pop %v483
        %v485 = vadd.f32 %v482, 1.0
        %v486 = vlog2.pop %v485
        %v487 = vmul.f32 %v486, 0.6931472
        %v488 = vmul.f32 -0.5, %v482
        %v489 = vadd.f32 %v488, 1.0
        %v490 = vmul.f32 %v489, %v482
        %v491 = vand.u32 2147483647, %v482
        %vm492 = vcmp.lt.f32.partialorder %v491, 0.0004427343
        %v493 = vsel %vm492, %v490, %v487
        %v494 = vadd.f32 %v484, 1.0
        %v495 = vlog2.pop %v494
        %v496 = vmul.f32 %v495, 0.6931472
        %v497 = vmul.f32 -0.5, %v484
        %v498 = vadd.f32 %v497, 1.0
        %v499 = vmul.f32 %v498, %v484
        %v500 = vand.u32 2147483647, %v484
        %vm501 = vcmp.lt.f32.partialorder %v500, 0.0004427343
        %v502 = vsel %vm501, %v499, %v496
        %v503 = vadd.f32 %v475, %v493
        %v504 = vadd.f32 %v476, %v502
        %v505 = vadd.f32 %v504, %v503
        %v506 = vadd.f32 %v505, 1e-08
        %v507 = vrcp.pop %v506
        %v508 = vmul.f32 %v506, %v507
        %v509 = vsub.f32 2.0, %v508
        %v510 = vmul.f32 %v507, %v509
        %511 = vst [vmem:[%s340] sm:$0xff] %v504
        %v512 = vmul.f32 %v504, %v510
        %513 = vst [vmem:[%s347] sm:$0xff] %v512
        %s514 = sand.u32 %s149, 1
        %s515 = scalar_lea.sflag [#allocation4], %s514
        %s516 = sand.u32 %s149, 1
        %s517 = smul.addr %s516, 8
        %s518 = scalar_lea.vmem [#allocation9], %s517
        %s519 = sand.u32 %s175, 1
        %s520 = scalar_lea.sflag [#allocation11], %s519
        %s521 = sand.u32 %s175, 1
        %s522 = smul.addr %s521, 8
        %s523 = scalar_lea.vmem [#allocation10], %s522
        // Predicated region
        $region57: #{tpu_custom_call.1} parent=39 // pred_check
          %p524 = pneg %p159
        $region58: #{tpu_custom_call.1} parent=39 // pred_check_branch
          %526 = sbr.rel (%p524) target = $region60
        $region59: #{tpu_custom_call.1} parent=39 // pred_region
          %528 = vsyncadd %s515, 0
          %s529 = smul.addr %s26, 8
          %s530 = scalar_lea.hbm %s5, %s529
          %s532 = sshll.u32 %s518, 4
          %s533 = int_to_ptr.vmem [resolvable:$true] %s532
          %s534 = sshll.u32 %s530, 4
          %s535 = int_to_ptr.hbm [resolvable:$true] %s534
          %537 = dma.vmem_to_hbm [thread:$0]  %s533, 128, %s535, %s515
        $region60: #{tpu_custom_call.1} parent=39 // pred_fallthru
          _
        // Predicated region
        $region61: #{tpu_custom_call.1} parent=39 // pred_check
          %p538 = pneg %p185
        $region62: #{tpu_custom_call.1} parent=39 // pred_check_branch
          %540 = sbr.rel (%p538) target = $region64
        $region63: #{tpu_custom_call.1} parent=39 // pred_region
          %542 = vsyncadd %s520, 0
          %s543 = smul.addr %s26, 8
          %s544 = scalar_lea.hbm %s6, %s543
          %s546 = sshll.u32 %s523, 4
          %s547 = int_to_ptr.vmem [resolvable:$true] %s546
          %s548 = sshll.u32 %s544, 4
          %s549 = int_to_ptr.hbm [resolvable:$true] %s548
          %551 = dma.vmem_to_hbm [thread:$0]  %s547, 128, %s549, %s520
        $region64: #{tpu_custom_call.1} parent=39 // pred_fallthru
          _
      $region40: #{tpu_custom_call.1} parent=5 // pred_fallthru
        _
      %p552 = scmp.le.s32.totalorder 2, %s21
      // Predicated region
      $region65: #{tpu_custom_call.1} parent=5 // pred_check
        %p553 = pneg %p552
      $region66: #{tpu_custom_call.1} parent=5 // pred_check_branch
        %555 = sbr.rel (%p553) target = $region68
      $region67: #{tpu_custom_call.1} parent=5 // pred_region
        %s556 = ssub.s32 %s21, 2
        // Predicated region
        $region69: #{tpu_custom_call.1} parent=67 // pred_check
          %p557 = pneg %p165
        $region70: #{tpu_custom_call.1} parent=67 // pred_check_branch
          %559 = sbr.rel (%p557) target = $region72
        $region71: #{tpu_custom_call.1} parent=67 // pred_region
          %s560 = sand.u32 %s150, 1
          %s561 = scalar_lea.sflag [#allocation4], %s560
          %s562 = sand.u32 %s150, 1
          %s563 = smul.addr %s562, 8
          %s564 = scalar_lea.vmem [#allocation9], %s563
          %566 = dma.done %s561, 128
        $region72: #{tpu_custom_call.1} parent=67 // pred_fallthru
          _
        // Predicated region
        $region73: #{tpu_custom_call.1} parent=67 // pred_check
          %p567 = pneg %p191
        $region74: #{tpu_custom_call.1} parent=67 // pred_check_branch
          %569 = sbr.rel (%p567) target = $region76
        $region75: #{tpu_custom_call.1} parent=67 // pred_region
          %s570 = sand.u32 %s176, 1
          %s571 = scalar_lea.sflag [#allocation11], %s570
          %s572 = sand.u32 %s176, 1
          %s573 = smul.addr %s572, 8
          %s574 = scalar_lea.vmem [#allocation10], %s573
          %576 = dma.done %s571, 128
        $region76: #{tpu_custom_call.1} parent=67 // pred_fallthru
          _
      $region68: #{tpu_custom_call.1} parent=5 // pred_fallthru
        _
    $region6: #{tpu_custom_call.1} parent=1 // loop_footer
      %s25 = sadd.s32 1, %s21
    $region7: #{tpu_custom_call.1} parent=1 // loop_footer_branch
      %20 = sbr.rel target = $region3
    $region8: #{tpu_custom_call.1} parent=1 // loop_exit
      _
    %577 = vsyncpa [#allocation3], 1
    %s578 = scalar_lea.sflag [#allocation3], 1
    %579 = vsyncpa %s578, 1
    %580 = vsyncpa [#allocation6], 1
    %581 = vsyncpa [#allocation4], 1
    %s582 = scalar_lea.sflag [#allocation4], 1
    %583 = vsyncpa %s582, 1
    %584 = vsyncpa [#allocation11], 1
    %s585 = scalar_lea.sflag [#allocation11], 1
    %586 = vsyncpa %s585, 1

</llo_original>
